<compile_context>
chip_gen: v7x
topology: tpu7x:2x2x1
jax: 0.10.0
libtpu: 0.0.40
codegen_flags: <defaults>
</compile_context>

<pallas_src>
import functools

import jax
import jax.numpy as jnp
from jax import lax
from jax.experimental import pallas as pl
from jax.experimental.pallas import tpu as pltpu


def _round_up(x, m):
    return ((x + m - 1) // m) * m


def _dice_bce_stats_kernel(p_ref, t_ref, inter_ref, denom_ref, bce_ref, *,
                           logits, rows, cols, mask_rows, mask_cols):
    i = pl.program_id(0)
    k = pl.program_id(1)

    # Output blocks are resident across the spatial (reduction) axis; zero at k==0.
    @pl.when(k == 0)
    def _():
        inter_ref[...] = jnp.zeros_like(inter_ref)
        denom_ref[...] = jnp.zeros_like(denom_ref)
        bce_ref[...] = jnp.zeros_like(bce_ref)

    x = p_ref[...].astype(jnp.float32)
    t = t_ref[...].astype(jnp.float32)
    tm, tk = x.shape

    # Mask off the ragged edge (only emitted when needed).  Replacement values
    # are chosen so masked elements contribute exactly 0 to all three sums:
    #   logits:  sigmoid(-1e4)=0 and the stable BCE term is 0 for (x=-1e4, t=0)
    #   probs :  p=0, t=0 gives 0 for all three terms (with PyTorch's log clamp).
    if mask_rows or mask_cols:
        valid = None
        if mask_rows:
            row_id = lax.broadcasted_iota(jnp.int32, (tm, tk), 0) + i * tm
            valid = row_id < rows
        if mask_cols:
            col_id = lax.broadcasted_iota(jnp.int32, (tm, tk), 1) + k * tk
            col_ok = col_id < cols
            valid = col_ok if valid is None else (valid & col_ok)
        neutral_pred = jnp.float32(-1e4) if logits else jnp.float32(0.0)
        x = jnp.where(valid, x, neutral_pred)
        t = jnp.where(valid, t, 0.0)

    if logits:
        s = jax.nn.sigmoid(x)
        # Numerically stable BCE-with-logits (matches nn.BCEWithLogitsLoss).
        bce_el = jnp.maximum(x, 0.0) - x * t + jnp.log1p(jnp.exp(-jnp.abs(x)))
    else:
        s = x
        # nn.BCELoss on probabilities (log clamped at -100 like PyTorch).
        log_p = jnp.maximum(jnp.log(x), -100.0)
        log_1mp = jnp.maximum(jnp.log1p(-x), -100.0)
        bce_el = -(t * log_p + (1.0 - t) * log_1mp)

    # Per-row partial sums for this spatial chunk (shape (TM, 1)).
    inter_ref[...] += jnp.sum(s * t, axis=-1, keepdims=True)
    denom_ref[...] += jnp.sum(s + t, axis=-1, keepdims=True)   # = sum(s) + sum(t)
    bce_ref[...] += jnp.sum(bce_el, axis=-1, keepdims=True)


def dice_bce_loss(y_pred, y, *, smooth=1, logits=True, separate=False,
                  row_tile=128, col_tile=2048):
    """DiceBCELoss forward. y_pred, y: (N, C, H, W). Returns scalar f32
    (or (bce, dice) if separate=True)."""
    N, C, H, W = y_pred.shape
    assert y.shape == y_pred.shape
    R, K = N * C, H * W

    p2 = y_pred.reshape(R, K)
    t2 = y.reshape(R, K)

    # Tile sizes: rows -> sublanes (multiple of 8), cols -> lanes (multiple of 128).
    # col_tile=2048 keeps the pipelined VMEM footprint at ~4 MiB for f32 inputs
    # (2 inputs x 2 buffers x 128x2048x4B), safe on v5e/v6e/v7x default limits.
    tm = min(row_tile, _round_up(R, 8))
    tk = min(col_tile, _round_up(K, 128))
    grid = (pl.cdiv(R, tm), pl.cdiv(K, tk))
    r_out = grid[0] * tm   # tiny output padding; sliced away below

    mask_rows = (R % tm) != 0
    mask_cols = (K % tk) != 0

    kernel = functools.partial(
        _dice_bce_stats_kernel, logits=logits, rows=R, cols=K,
        mask_rows=mask_rows, mask_cols=mask_cols)

    row_out = jax.ShapeDtypeStruct((r_out, 1), jnp.float32)
    inter, denom, bce_sum = pl.pallas_call(
        kernel,
        out_shape=(row_out, row_out, row_out),
        grid_spec=pltpu.PrefetchScalarGridSpec(
            num_scalar_prefetch=0,
            grid=grid,
            in_specs=[
                pl.BlockSpec((tm, tk), lambda i, k: (i, k)),
                pl.BlockSpec((tm, tk), lambda i, k: (i, k)),
            ],
            out_specs=(
                pl.BlockSpec((tm, 1), lambda i, k: (i, 0)),
                pl.BlockSpec((tm, 1), lambda i, k: (i, 0)),
                pl.BlockSpec((tm, 1), lambda i, k: (i, 0)),
            ),
        ),
        compiler_params=pltpu.CompilerParams(
            dimension_semantics=("parallel", "arbitrary"),
        ),
    )(p2, t2)

    # Finalize (tiny: N*C floats) in plain JAX.
    inter = inter[:R, 0]
    denom = denom[:R, 0]
    bce_sum = bce_sum[:R, 0]

    sm = jnp.float32(smooth)
    dice_per_rc = (2.0 * inter + sm) / (denom + sm)
    # mean over C then over N == flat mean over the N*C per-(n,c) dice values.
    dice_loss = 1.0 - jnp.mean(dice_per_rc)
    bce = jnp.sum(bce_sum) / jnp.float32(N * C * H * W)

    return (bce, dice_loss) if separate else bce + dice_loss


def _reference(y_pred, y, smooth=1, logits=True):
    """Pure-JAX reference mirroring the PyTorch DiceBCELoss forward."""
    x = y_pred.astype(jnp.float32)
    t = y.astype(jnp.float32)
    p = jax.nn.sigmoid(x) if logits else x
    inter = jnp.sum(p * t, axis=(2, 3))
    dice = (2.0 * inter + smooth) / (
        jnp.sum(p, axis=(2, 3)) + jnp.sum(t, axis=(2, 3)) + smooth
    )
    dice_loss = 1.0 - jnp.mean(jnp.mean(dice, axis=1), axis=0)
    if logits:
        bce = jnp.mean(jnp.maximum(x, 0.0) - x * t + jnp.log1p(jnp.exp(-jnp.abs(x))))
    else:
        bce = jnp.mean(-(t * jnp.log(x) + (1.0 - t) * jnp.log1p(-x)))
    return bce + dice_loss


if __name__ == "__main__":
    key = jax.random.PRNGKey(0)
    k1, k2 = jax.random.split(key)

    N, C, H, W = 2, 4, 16, 16
    y_pred = jax.random.normal(k1, (N, C, H, W), dtype=jnp.float32)        # logits
    y = (jax.random.uniform(k2, (N, C, H, W)) > 0.5).astype(jnp.float32)   # binary targets

    loss_fn = jax.jit(functools.partial(dice_bce_loss, smooth=1, logits=True))
    loss = jax.block_until_ready(loss_fn(y_pred, y))

    ref = jax.block_until_ready(_reference(y_pred, y, smooth=1, logits=True))
    assert jnp.allclose(loss, ref, atol=1e-5, rtol=1e-5), (loss, ref)

    print("KERNEL_OK")
</pallas_src>

<mosaic_0001>
module attributes {stable_mosaic.version = 11 : i64} {
  func.func @_dice_bce_stats_kernel(%arg0: i32, %arg1: i32, %arg2: memref<8x256xf32, #tpu.memory_space<vmem>>, %arg3: memref<8x256xf32, #tpu.memory_space<vmem>>, %arg4: memref<8x1xf32, #tpu.memory_space<vmem>>, %arg5: memref<8x1xf32, #tpu.memory_space<vmem>>, %arg6: memref<8x1xf32, #tpu.memory_space<vmem>>) attributes {dimension_semantics = [#tpu.dimension_semantics<parallel>, #tpu.dimension_semantics<arbitrary>], iteration_bounds = array<i64: 1, 1>, scalar_prefetch = 0 : i64, scratch_operands = 0 : i64, tpu.core_type = #tpu.core_type<tc>, window_params = [{transform_indices = @transform_0, window_bounds = array<i64: 8, 256>}, {transform_indices = @transform_1, window_bounds = array<i64: 8, 256>}, {transform_indices = @transform_2, window_bounds = array<i64: 8, 1>}, {transform_indices = @transform_3, window_bounds = array<i64: 8, 1>}, {transform_indices = @transform_4, window_bounds = array<i64: 8, 1>}]} {
    %c0_i32 = arith.constant 0 : i32
    %0 = arith.cmpi eq, %arg1, %c0_i32 : i32
    %1 = arith.extui %0 : i1 to i32
    %c0_i32_0 = arith.constant 0 : i32
    %2 = arith.cmpi ne, %1, %c0_i32_0 : i32
    scf.if %2 {
      %cst_21 = arith.constant 0.000000e+00 : f32
      %37 = vector.broadcast %cst_21 : f32 to vector<8x1xf32>
      %c0_22 = arith.constant 0 : index
      %c0_23 = arith.constant 0 : index
      %38 = vector.load %arg4[%c0_22, %c0_23] : memref<8x1xf32, #tpu.memory_space<vmem>>, vector<8x1xf32>
      tpu.vector_store %arg4[%c0_22, %c0_23], %37 {strides = array<i32>} : memref<8x1xf32, #tpu.memory_space<vmem>>, vector<8x1xf32>,
      %cst_24 = arith.constant 0.000000e+00 : f32
      %39 = vector.broadcast %cst_24 : f32 to vector<8x1xf32>
      %c0_25 = arith.constant 0 : index
      %c0_26 = arith.constant 0 : index
      %40 = vector.load %arg5[%c0_25, %c0_26] : memref<8x1xf32, #tpu.memory_space<vmem>>, vector<8x1xf32>
      tpu.vector_store %arg5[%c0_25, %c0_26], %39 {strides = array<i32>} : memref<8x1xf32, #tpu.memory_space<vmem>>, vector<8x1xf32>,
      %cst_27 = arith.constant 0.000000e+00 : f32
      %41 = vector.broadcast %cst_27 : f32 to vector<8x1xf32>
      %c0_28 = arith.constant 0 : index
      %c0_29 = arith.constant 0 : index
      %42 = vector.load %arg6[%c0_28, %c0_29] : memref<8x1xf32, #tpu.memory_space<vmem>>, vector<8x1xf32>
      tpu.vector_store %arg6[%c0_28, %c0_29], %41 {strides = array<i32>} : memref<8x1xf32, #tpu.memory_space<vmem>>, vector<8x1xf32>,
    } else {
    }
    %c0 = arith.constant 0 : index
    %c0_1 = arith.constant 0 : index
    %3 = vector.load %arg2[%c0, %c0_1] : memref<8x256xf32, #tpu.memory_space<vmem>>, vector<8x256xf32>
    %c0_2 = arith.constant 0 : index
    %c0_3 = arith.constant 0 : index
    %4 = vector.load %arg3[%c0_2, %c0_3] : memref<8x256xf32, #tpu.memory_space<vmem>>, vector<8x256xf32>
    %5 = arith.negf %3 : vector<8x256xf32>
    %6 = math.exp %5 : vector<8x256xf32>
    %cst = arith.constant 1.000000e+00 : f32
    %7 = vector.broadcast %cst : f32 to vector<8x256xf32>
    %8 = arith.addf %7, %6 : vector<8x256xf32>
    %9 = arith.divf %7, %8 : vector<8x256xf32>
    %cst_4 = arith.constant 0.000000e+00 : f32
    %10 = vector.broadcast %cst_4 : f32 to vector<8x256xf32>
    %11 = arith.maximumf %3, %10 : vector<8x256xf32>
    %12 = arith.mulf %3, %4 : vector<8x256xf32>
    %13 = arith.subf %11, %12 : vector<8x256xf32>
    %14 = math.absf %3 : vector<8x256xf32>
    %cst_5 = arith.constant 0.000000e+00 : f32
    %15 = vector.broadcast %cst_5 : f32 to vector<8x256xf32>
    %16 = arith.subf %15, %14 : vector<8x256xf32>
    %17 = math.exp %16 : vector<8x256xf32>
    %18 = math.log1p %17 : vector<8x256xf32>
    %19 = arith.addf %13, %18 : vector<8x256xf32>
    %c0_6 = arith.constant 0 : index
    %c0_7 = arith.constant 0 : index
    %20 = vector.load %arg4[%c0_6, %c0_7] : memref<8x1xf32, #tpu.memory_space<vmem>>, vector<8x1xf32>
    %21 = arith.mulf %9, %4 : vector<8x256xf32>
    %cst_8 = arith.constant dense<0.000000e+00> : vector<8xf32>
    %22 = vector.multi_reduction <add>, %21, %cst_8 [1] : vector<8x256xf32> to vector<8xf32>
    %23 = vector.shape_cast %22 : vector<8xf32> to vector<8x1xf32>
    %24 = arith.addf %20, %23 : vector<8x1xf32>
    %c0_9 = arith.constant 0 : index
    %c0_10 = arith.constant 0 : index
    %25 = vector.load %arg4[%c0_9, %c0_10] : memref<8x1xf32, #tpu.memory_space<vmem>>, vector<8x1xf32>
    tpu.vector_store %arg4[%c0_9, %c0_10], %24 {strides = array<i32>} : memref<8x1xf32, #tpu.memory_space<vmem>>, vector<8x1xf32>,
    %c0_11 = arith.constant 0 : index
    %c0_12 = arith.constant 0 : index
    %26 = vector.load %arg5[%c0_11, %c0_12] : memref<8x1xf32, #tpu.memory_space<vmem>>, vector<8x1xf32>
    %27 = arith.addf %9, %4 : vector<8x256xf32>
    %cst_13 = arith.constant dense<0.000000e+00> : vector<8xf32>
    %28 = vector.multi_reduction <add>, %27, %cst_13 [1] : vector<8x256xf32> to vector<8xf32>
    %29 = vector.shape_cast %28 : vector<8xf32> to vector<8x1xf32>
    %30 = arith.addf %26, %29 : vector<8x1xf32>
    %c0_14 = arith.constant 0 : index
    %c0_15 = arith.constant 0 : index
    %31 = vector.load %arg5[%c0_14, %c0_15] : memref<8x1xf32, #tpu.memory_space<vmem>>, vector<8x1xf32>
    tpu.vector_store %arg5[%c0_14, %c0_15], %30 {strides = array<i32>} : memref<8x1xf32, #tpu.memory_space<vmem>>, vector<8x1xf32>,
    %c0_16 = arith.constant 0 : index
    %c0_17 = arith.constant 0 : index
    %32 = vector.load %arg6[%c0_16, %c0_17] : memref<8x1xf32, #tpu.memory_space<vmem>>, vector<8x1xf32>
    %cst_18 = arith.constant dense<0.000000e+00> : vector<8xf32>
    %33 = vector.multi_reduction <add>, %19, %cst_18 [1] : vector<8x256xf32> to vector<8xf32>
    %34 = vector.shape_cast %33 : vector<8xf32> to vector<8x1xf32>
    %35 = arith.addf %32, %34 : vector<8x1xf32>
    %c0_19 = arith.constant 0 : index
    %c0_20 = arith.constant 0 : index
    %36 = vector.load %arg6[%c0_19, %c0_20] : memref<8x1xf32, #tpu.memory_space<vmem>>, vector<8x1xf32>
    tpu.vector_store %arg6[%c0_19, %c0_20], %35 {strides = array<i32>} : memref<8x1xf32, #tpu.memory_space<vmem>>, vector<8x1xf32>,
    return
  }
  func.func @transform_0(%arg0: i32, %arg1: i32) -> (i32, i32) {
    %c0_i32 = arith.constant 0 : i32
    return %arg0, %arg1 : i32, i32
  }
  func.func @transform_1(%arg0: i32, %arg1: i32) -> (i32, i32) {
    %c0_i32 = arith.constant 0 : i32
    return %arg0, %arg1 : i32, i32
  }
  func.func @transform_2(%arg0: i32, %arg1: i32) -> (i32, i32) {
    %c0_i32 = arith.constant 0 : i32
    %c0_i32_0 = arith.constant 0 : i32
    return %arg0, %c0_i32 : i32, i32
  }
  func.func @transform_3(%arg0: i32, %arg1: i32) -> (i32, i32) {
    %c0_i32 = arith.constant 0 : i32
    %c0_i32_0 = arith.constant 0 : i32
    return %arg0, %c0_i32 : i32, i32
  }
  func.func @transform_4(%arg0: i32, %arg1: i32) -> (i32, i32) {
    %c0_i32 = arith.constant 0 : i32
    %c0_i32_0 = arith.constant 0 : i32
    return %arg0, %c0_i32 : i32, i32
  }
}

</mosaic_0001>

<llo_original>
// kernel: dice_bce_loss.1
$region0: #{dice_bce_loss.1}
  #allocation0 [shape = 'u32[]', space=smem, size = 0x4, offset = 0x4, fixed_abs, tag = 'smem constant byte address 0x4 - core index']
  #allocation1 [shape = 'u32[144,128]{1,0:T(1,128)}', space=vmem, size = 0x12000, scoped, tag = 'internal scratch']
  %s0 = inlined_call_operand.vmem [shape: f32[8,256], index: 0, kind: input, shape index: {}]
  %s1 = inlined_call_operand.vmem [shape: f32[8,256], index: 1, kind: input, shape index: {}]
  %s2 = inlined_call_operand.vmem [shape: f32[8,1], index: 2, kind: output, shape index: {0}]
  %s3 = inlined_call_operand.vmem [shape: f32[8,1], index: 3, kind: output, shape index: {1}]
  %s4 = inlined_call_operand.vmem [shape: f32[8,1], index: 4, kind: output, shape index: {2}]
  %5 = xla_tuple %s2, %s3, %s4
  %s6 = sld [smem:[#allocation0]]
  $region38: #{dice_bce_loss.1} parent=0
    _
  %s8 = ssub.s32 1, %s6
  %s9 = scalar_select 0, %s8, %s6
  // Predicated region
  $region2: #{dice_bce_loss.1} parent=0 // pred_check
    _
  $region3: #{dice_bce_loss.1} parent=0 // pred_check_branch
    %11 = sbr.rel (0) target = $region5
  $region4: #{dice_bce_loss.1} parent=0 // pred_region
    _
  $region5: #{dice_bce_loss.1} parent=0 // pred_fallthru
    _
  // Predicated region
  $region6: #{dice_bce_loss.1} parent=0 // pred_check
    _
  $region7: #{dice_bce_loss.1} parent=0 // pred_check_branch
    %13 = sbr.rel (0) target = $region9
  $region8: #{dice_bce_loss.1} parent=0 // pred_region
    _
  $region9: #{dice_bce_loss.1} parent=0 // pred_fallthru
    _
  %p14 = scmp.eq.s32.totalorder 0, 0
  // Predicated region
  $region10: #{dice_bce_loss.1} parent=0 // pred_check
    %p15 = pneg %p14
  $region11: #{dice_bce_loss.1} parent=0 // pred_check_branch
    %17 = sbr.rel (%p15) target = $region13
  $region12: #{dice_bce_loss.1} parent=0 // pred_region
    %vm18 = vcmask 7168
    %19 = vst.msk [vmem:[%s2] sm:$0xff] %vm18, 0.0
    %20 = vst.msk [vmem:[%s3] sm:$0xff] %vm18, 0.0
    %21 = vst.msk [vmem:[%s4] sm:$0xff] %vm18, 0.0
  $region13: #{dice_bce_loss.1} parent=0 // pred_fallthru
    _
  %v22 = vld [vmem:[%s0] sm:$0xff]
  %v23 = vld [vmem:[%s0 + $0x8] sm:$0xff]
  %v24 = vld [vmem:[%s1] sm:$0xff]
  %v25 = vld [vmem:[%s1 + $0x8] sm:$0xff]
  %v26 = vxor.u32 %v22, 2147483648
  %v27 = vxor.u32 %v23, 2147483648
  %v28 = vmul.f32 %v26, 1.442695
  %v29 = vpow.pop %v28
  %v30 = vmul.f32 %v27, 1.442695
  %v31 = vpow.pop %v30
  %v32 = vadd.f32 %v29, 1.0
  %v33 = vadd.f32 %v31, 1.0
  %v34 = vrcp.pop %v32
  %v35 = vmul.f32 1.0, %v34
  %v36 = vrcp.pop %v33
  %v37 = vmul.f32 1.0, %v36
  %v38 = vmax.f32 %v22, 0.0
  %v39 = vmax.f32 %v23, 0.0
  %v40 = vmul.f32 %v22, %v24
  %v41 = vmul.f32 %v23, %v25
  %v42 = vsub.f32 %v38, %v40
  %v43 = vsub.f32 %v39, %v41
  %v44 = vand.u32 2147483647, %v22
  %v45 = vand.u32 2147483647, %v23
  %v46 = vsub.f32 0.0, %v44
  %v47 = vsub.f32 0.0, %v45
  %v48 = vmul.f32 %v46, 1.442695
  %v49 = vpow.pop %v48
  %v50 = vmul.f32 %v47, 1.442695
  %v51 = vpow.pop %v50
  %v52 = vadd.f32 %v49, 1.0
  %v53 = vlog2.pop %v52
  %v54 = vmul.f32 %v53, 0.6931472
  %v55 = vmul.f32 -0.5, %v49
  %v56 = vadd.f32 %v55, 1.0
  %v57 = vmul.f32 %v56, %v49
  %v58 = vand.u32 2147483647, %v49
  %vm59 = vcmp.lt.f32.partialorder %v58, 0.0004427343
  %v60 = vsel %vm59, %v57, %v54
  %v61 = vadd.f32 %v51, 1.0
  %v62 = vlog2.pop %v61
  %v63 = vmul.f32 %v62, 0.6931472
  %v64 = vmul.f32 -0.5, %v51
  %v65 = vadd.f32 %v64, 1.0
  %v66 = vmul.f32 %v65, %v51
  %v67 = vand.u32 2147483647, %v51
  %vm68 = vcmp.lt.f32.partialorder %v67, 0.0004427343
  %v69 = vsel %vm68, %v66, %v63
  %v70 = vadd.f32 %v42, %v60
  %v71 = vadd.f32 %v43, %v69
  %v72 = vld [vmem:[%s2] sm:$0xff]
  %v73 = vmul.f32 %v35, %v24
  %v74 = vmul.f32 %v37, %v25
  %v75 = vadd.f32 %v73, %v74
  %76 = vadd.xlane.f32.xlu0 %v75
  %v77 = vpop.xlane.xlu0 %76
  %v78 = vadd.f32 %v72, %v77
  %vm79 = vcmask 7168
  %80 = vst.msk [vmem:[%s2] sm:$0xff] %vm79, %v78
  %v81 = vld [vmem:[%s3] sm:$0xff]
  %v82 = vadd.f32 %v35, %v24
  %v83 = vadd.f32 %v37, %v25
  %v84 = vadd.f32 %v82, %v83
  %85 = vadd.xlane.f32.xlu0 %v84
  %v86 = vpop.xlane.xlu0 %85
  %v87 = vadd.f32 %v81, %v86
  %88 = vst.msk [vmem:[%s3] sm:$0xff] %vm79, %v87
  %v89 = vld [vmem:[%s4] sm:$0xff]
  %v90 = vadd.f32 %v70, %v71
  %91 = vadd.xlane.f32.xlu0 %v90
  %v92 = vpop.xlane.xlu0 %91
  %v93 = vadd.f32 %v89, %v92
  %94 = vst.msk [vmem:[%s4] sm:$0xff] %vm79, %v93
  // Predicated region
  $region14: #{dice_bce_loss.1} parent=0 // pred_check
    _
  $region15: #{dice_bce_loss.1} parent=0 // pred_check_branch
    %96 = sbr.rel (0) target = $region17
  $region16: #{dice_bce_loss.1} parent=0 // pred_region
    _
  $region17: #{dice_bce_loss.1} parent=0 // pred_fallthru
    _
  // Predicated region
  $region18: #{dice_bce_loss.1} parent=0 // pred_check
    _
  $region19: #{dice_bce_loss.1} parent=0 // pred_check_branch
    %98 = sbr.rel (0) target = $region21
  $region20: #{dice_bce_loss.1} parent=0 // pred_region
    _
  $region21: #{dice_bce_loss.1} parent=0 // pred_fallthru
    _
  // Predicated region
  $region22: #{dice_bce_loss.1} parent=0 // pred_check
    _
  $region23: #{dice_bce_loss.1} parent=0 // pred_check_branch
    %100 = sbr.rel (0) target = $region25
  $region24: #{dice_bce_loss.1} parent=0 // pred_region
    _
  $region25: #{dice_bce_loss.1} parent=0 // pred_fallthru
    _
  // Predicated region
  $region26: #{dice_bce_loss.1} parent=0 // pred_check
    _
  $region27: #{dice_bce_loss.1} parent=0 // pred_check_branch
    %102 = sbr.rel (0) target = $region29
  $region28: #{dice_bce_loss.1} parent=0 // pred_region
    _
  $region29: #{dice_bce_loss.1} parent=0 // pred_fallthru
    _
  // Predicated region
  $region30: #{dice_bce_loss.1} parent=0 // pred_check
    _
  $region31: #{dice_bce_loss.1} parent=0 // pred_check_branch
    %104 = sbr.rel (0) target = $region33
  $region32: #{dice_bce_loss.1} parent=0 // pred_region
    _
  $region33: #{dice_bce_loss.1} parent=0 // pred_fallthru
    _
  // Predicated region
  $region34: #{dice_bce_loss.1} parent=0 // pred_check
    _
  $region35: #{dice_bce_loss.1} parent=0 // pred_check_branch
    %106 = sbr.rel (0) target = $region37
  $region36: #{dice_bce_loss.1} parent=0 // pred_region
    _
  $region37: #{dice_bce_loss.1} parent=0 // pred_fallthru
    _

</llo_original>
